<compile_context>
chip_gen: v7x
topology: tpu7x:2x2x1
jax: 0.10.0
libtpu: 0.0.40
codegen_flags: <defaults>
</compile_context>

<pallas_src>
import jax
import jax.numpy as jnp
from jax.experimental import pallas as pl
from jax.experimental.pallas import tpu as pltpu

LANE = 128


def mlp_kernel(x_ref, w1_ref, b1_ref, w2_ref, b2_ref, w3_ref, b3_ref, o_ref):
    # fc1 + relu  (bf16 operands on the MXU, f32 accumulate; bias/ReLU in f32 on the VPU)
    h1 = jnp.dot(x_ref[...], w1_ref[...], preferred_element_type=jnp.float32)
    h1 = jnp.maximum(h1 + b1_ref[...], 0.0)
    # fc2 + relu
    h2 = jnp.dot(h1.astype(w2_ref.dtype), w2_ref[...], preferred_element_type=jnp.float32)
    h2 = jnp.maximum(h2 + b2_ref[...], 0.0)
    # fc3 (no activation); output block is lane-dense (padded to 128 columns)
    out = jnp.dot(h2.astype(w3_ref.dtype), w3_ref[...], preferred_element_type=jnp.float32)
    o_ref[...] = (out + b3_ref[...]).astype(o_ref.dtype)


def network_forward(x, params, *, tile_b=128, use_bf16=True):
    """Forward pass of Network. x: (B, D_in) f32. Returns (B, n_outputs) f32."""
    (w1, b1), (w2, b2), (w3, b3) = params
    B, d_in = x.shape
    fc1 = w1.shape[1]
    fc2 = w2.shape[1]
    n_out = w3.shape[1]

    # Pad the final feature dim to lane width so the output store is lane-dense.
    n_out_pad = ((n_out + LANE - 1) // LANE) * LANE
    w3p = jnp.pad(w3, ((0, 0), (0, n_out_pad - n_out)))
    b3p = jnp.pad(b3, ((0, 0), (0, n_out_pad - n_out)))

    # Pad the batch to a multiple of the tile so the grid is exact.
    b_pad = ((B + tile_b - 1) // tile_b) * tile_b
    if b_pad != B:
        x = jnp.pad(x, ((0, b_pad - B), (0, 0)))

    mxu_dtype = jnp.bfloat16 if use_bf16 else jnp.float32
    x_c = x.astype(mxu_dtype)
    w1_c = w1.astype(mxu_dtype)
    w2_c = w2.astype(mxu_dtype)
    w3_c = w3p.astype(mxu_dtype)
    b1_f = b1.astype(jnp.float32)
    b2_f = b2.astype(jnp.float32)
    b3_f = b3p.astype(jnp.float32)

    resident = lambda i: (0, 0)  # weights/biases: same block every step -> VMEM-resident

    out = pl.pallas_call(
        mlp_kernel,
        out_shape=jax.ShapeDtypeStruct((b_pad, n_out_pad), jnp.float32),
        grid_spec=pltpu.PrefetchScalarGridSpec(
            num_scalar_prefetch=0,
            grid=(b_pad // tile_b,),
            in_specs=[
                pl.BlockSpec((tile_b, d_in), lambda i: (i, 0)),   # activation stream
                pl.BlockSpec((d_in, fc1), resident),
                pl.BlockSpec((1, fc1), resident),
                pl.BlockSpec((fc1, fc2), resident),
                pl.BlockSpec((1, fc2), resident),
                pl.BlockSpec((fc2, n_out_pad), resident),
                pl.BlockSpec((1, n_out_pad), resident),
            ],
            out_specs=pl.BlockSpec((tile_b, n_out_pad), lambda i: (i, 0)),
        ),
        compiler_params=pltpu.CompilerParams(dimension_semantics=("parallel",)),
    )(x_c, w1_c, b1_f, w2_c, b2_f, w3_c, b3_f)

    return out[:B, :n_out]


def xavier_uniform(key, fan_in, fan_out):
    # matches nn.init.xavier_uniform_ (gain=1); stored already as (in, out)
    limit = jnp.sqrt(6.0 / (fan_in + fan_out))
    return jax.random.uniform(key, (fan_in, fan_out), jnp.float32, -limit, limit)


def linear_bias(key, fan_in, fan_out):
    # PyTorch Linear default bias init: U(-1/sqrt(fan_in), 1/sqrt(fan_in))
    bound = 1.0 / jnp.sqrt(jnp.float32(fan_in))
    return jax.random.uniform(key, (1, fan_out), jnp.float32, -bound, bound)


def init_network_params(key, input_dim, fc1_dims, fc2_dims, n_outputs):
    ks = jax.random.split(key, 6)
    w1 = xavier_uniform(ks[0], input_dim, fc1_dims)
    b1 = linear_bias(ks[1], input_dim, fc1_dims)
    w2 = xavier_uniform(ks[2], fc1_dims, fc2_dims)
    b2 = linear_bias(ks[3], fc1_dims, fc2_dims)
    w3 = xavier_uniform(ks[4], fc2_dims, n_outputs)
    b3 = linear_bias(ks[5], fc2_dims, n_outputs)
    return ((w1, b1), (w2, b2), (w3, b3))


if __name__ == "__main__":
    # Network(input_dims=(16,), fc1_dims=64, fc2_dims=32, n_outputs=8).
    # Batch = 256 so the 1-D batch grid (TILE_B=128) actually pipelines (2 steps).
    B, D_IN, FC1, FC2, N_OUT = 256, 16, 64, 32, 8
    TILE_B = 128

    key = jax.random.PRNGKey(0)
    k_params, k_x = jax.random.split(key)
    params = init_network_params(k_params, D_IN, FC1, FC2, N_OUT)
    x = jax.random.normal(k_x, (B, D_IN), jnp.float32)

    out = network_forward(x, params, tile_b=TILE_B, use_bf16=True)
    out = jax.block_until_ready(out)
    assert out.shape == (B, N_OUT)

    # Reference 1: same math with bf16 MXU operands / f32 accumulation (tight tolerance).
    (w1, b1), (w2, b2), (w3, b3) = params
    xb = x.astype(jnp.bfloat16)
    w1b, w2b, w3b = (w.astype(jnp.bfloat16) for w in (w1, w2, w3))
    h = jnp.maximum(jnp.dot(xb, w1b, preferred_element_type=jnp.float32) + b1, 0.0)
    h = jnp.maximum(jnp.dot(h.astype(jnp.bfloat16), w2b,
                            preferred_element_type=jnp.float32) + b2, 0.0)
    ref_bf16 = jnp.dot(h.astype(jnp.bfloat16), w3b,
                       preferred_element_type=jnp.float32) + b3
    assert jnp.allclose(out, ref_bf16, atol=2e-3, rtol=2e-3)

    # Reference 2: full-f32 PyTorch-equivalent forward (loose tolerance, bf16 rounding).
    h32 = jnp.maximum(x @ w1 + b1, 0.0)
    h32 = jnp.maximum(h32 @ w2 + b2, 0.0)
    ref_f32 = h32 @ w3 + b3
    assert jnp.allclose(out, ref_f32, atol=5e-2, rtol=5e-2)

    print("KERNEL_OK")
</pallas_src>

<mosaic_0001>
module attributes {stable_mosaic.version = 11 : i64} {
  func.func @mlp_kernel(%arg0: i32, %arg1: memref<128x16xbf16, #tpu.memory_space<vmem>>, %arg2: memref<16x64xbf16, #tpu.memory_space<vmem>>, %arg3: memref<1x64xf32, #tpu.memory_space<vmem>>, %arg4: memref<64x32xbf16, #tpu.memory_space<vmem>>, %arg5: memref<1x32xf32, #tpu.memory_space<vmem>>, %arg6: memref<32x128xbf16, #tpu.memory_space<vmem>>, %arg7: memref<1x128xf32, #tpu.memory_space<vmem>>, %arg8: memref<128x128xf32, #tpu.memory_space<vmem>>) attributes {dimension_semantics = [#tpu.dimension_semantics<parallel>], iteration_bounds = array<i64: 2>, scalar_prefetch = 0 : i64, scratch_operands = 0 : i64, tpu.core_type = #tpu.core_type<tc>, window_params = [{transform_indices = @transform_0, window_bounds = array<i64: 128, 16>}, {pipeline_mode = #tpu.pipeline_mode<synchronous>, transform_indices = @transform_1, window_bounds = array<i64: 16, 64>}, {pipeline_mode = #tpu.pipeline_mode<synchronous>, transform_indices = @transform_2, window_bounds = array<i64: 1, 64>}, {pipeline_mode = #tpu.pipeline_mode<synchronous>, transform_indices = @transform_3, window_bounds = array<i64: 64, 32>}, {pipeline_mode = #tpu.pipeline_mode<synchronous>, transform_indices = @transform_4, window_bounds = array<i64: 1, 32>}, {pipeline_mode = #tpu.pipeline_mode<synchronous>, transform_indices = @transform_5, window_bounds = array<i64: 32, 128>}, {pipeline_mode = #tpu.pipeline_mode<synchronous>, transform_indices = @transform_6, window_bounds = array<i64: 1, 128>}, {transform_indices = @transform_7, window_bounds = array<i64: 128, 128>}]} {
    %c0 = arith.constant 0 : index
    %c0_0 = arith.constant 0 : index
    %0 = vector.load %arg1[%c0, %c0_0] : memref<128x16xbf16, #tpu.memory_space<vmem>>, vector<128x16xbf16>
    %c0_1 = arith.constant 0 : index
    %c0_2 = arith.constant 0 : index
    %1 = vector.load %arg2[%c0_1, %c0_2] : memref<16x64xbf16, #tpu.memory_space<vmem>>, vector<16x64xbf16>
    %cst = arith.constant dense<0.000000e+00> : vector<128x64xf32>
    %2 = tpu.matmul %0, %1, %cst {dimension_numbers = #tpu.dot_dimension_numbers<[1], [0], [0], [1], [0, 0, 1, 1], [], []>} : vector<128x16xbf16>, vector<16x64xbf16>, vector<128x64xf32> -> vector<128x64xf32>
    %c0_3 = arith.constant 0 : index
    %c0_4 = arith.constant 0 : index
    %3 = vector.load %arg3[%c0_3, %c0_4] : memref<1x64xf32, #tpu.memory_space<vmem>>, vector<1x64xf32>
    %4 = vector.broadcast %3 : vector<1x64xf32> to vector<128x64xf32>
    %5 = arith.addf %2, %4 : vector<128x64xf32>
    %cst_5 = arith.constant 0.000000e+00 : f32
    %6 = vector.broadcast %cst_5 : f32 to vector<128x64xf32>
    %7 = arith.maximumf %5, %6 : vector<128x64xf32>
    %8 = arith.truncf %7 : vector<128x64xf32> to vector<128x64xbf16>
    %c0_6 = arith.constant 0 : index
    %c0_7 = arith.constant 0 : index
    %9 = vector.load %arg4[%c0_6, %c0_7] : memref<64x32xbf16, #tpu.memory_space<vmem>>, vector<64x32xbf16>
    %cst_8 = arith.constant dense<0.000000e+00> : vector<128x32xf32>
    %10 = tpu.matmul %8, %9, %cst_8 {dimension_numbers = #tpu.dot_dimension_numbers<[1], [0], [0], [1], [0, 0, 1, 1], [], []>} : vector<128x64xbf16>, vector<64x32xbf16>, vector<128x32xf32> -> vector<128x32xf32>
    %c0_9 = arith.constant 0 : index
    %c0_10 = arith.constant 0 : index
    %11 = vector.load %arg5[%c0_9, %c0_10] : memref<1x32xf32, #tpu.memory_space<vmem>>, vector<1x32xf32>
    %12 = vector.broadcast %11 : vector<1x32xf32> to vector<128x32xf32>
    %13 = arith.addf %10, %12 : vector<128x32xf32>
    %cst_11 = arith.constant 0.000000e+00 : f32
    %14 = vector.broadcast %cst_11 : f32 to vector<128x32xf32>
    %15 = arith.maximumf %13, %14 : vector<128x32xf32>
    %16 = arith.truncf %15 : vector<128x32xf32> to vector<128x32xbf16>
    %c0_12 = arith.constant 0 : index
    %c0_13 = arith.constant 0 : index
    %17 = vector.load %arg6[%c0_12, %c0_13] : memref<32x128xbf16, #tpu.memory_space<vmem>>, vector<32x128xbf16>
    %cst_14 = arith.constant dense<0.000000e+00> : vector<128x128xf32>
    %18 = tpu.matmul %16, %17, %cst_14 {dimension_numbers = #tpu.dot_dimension_numbers<[1], [0], [0], [1], [0, 0, 1, 1], [], []>} : vector<128x32xbf16>, vector<32x128xbf16>, vector<128x128xf32> -> vector<128x128xf32>
    %c0_15 = arith.constant 0 : index
    %c0_16 = arith.constant 0 : index
    %19 = vector.load %arg7[%c0_15, %c0_16] : memref<1x128xf32, #tpu.memory_space<vmem>>, vector<1x128xf32>
    %20 = vector.broadcast %19 : vector<1x128xf32> to vector<128x128xf32>
    %21 = arith.addf %18, %20 : vector<128x128xf32>
    %c0_17 = arith.constant 0 : index
    %c0_18 = arith.constant 0 : index
    %22 = vector.load %arg8[%c0_17, %c0_18] : memref<128x128xf32, #tpu.memory_space<vmem>>, vector<128x128xf32>
    tpu.vector_store %arg8[%c0_17, %c0_18], %21 {strides = array<i32>} : memref<128x128xf32, #tpu.memory_space<vmem>>, vector<128x128xf32>,
    return
  }
  func.func @transform_0(%arg0: i32) -> (i32, i32) {
    %c0_i32 = arith.constant 0 : i32
    %c0_i32_0 = arith.constant 0 : i32
    return %arg0, %c0_i32 : i32, i32
  }
  func.func @transform_1(%arg0: i32) -> (i32, i32) {
    %c0_i32 = arith.constant 0 : i32
    %c0_i32_0 = arith.constant 0 : i32
    %c0_i32_1 = arith.constant 0 : i32
    return %c0_i32, %c0_i32_0 : i32, i32
  }
  func.func @transform_2(%arg0: i32) -> (i32, i32) {
    %c0_i32 = arith.constant 0 : i32
    %c0_i32_0 = arith.constant 0 : i32
    %c0_i32_1 = arith.constant 0 : i32
    return %c0_i32, %c0_i32_0 : i32, i32
  }
  func.func @transform_3(%arg0: i32) -> (i32, i32) {
    %c0_i32 = arith.constant 0 : i32
    %c0_i32_0 = arith.constant 0 : i32
    %c0_i32_1 = arith.constant 0 : i32
    return %c0_i32, %c0_i32_0 : i32, i32
  }
  func.func @transform_4(%arg0: i32) -> (i32, i32) {
    %c0_i32 = arith.constant 0 : i32
    %c0_i32_0 = arith.constant 0 : i32
    %c0_i32_1 = arith.constant 0 : i32
    return %c0_i32, %c0_i32_0 : i32, i32
  }
  func.func @transform_5(%arg0: i32) -> (i32, i32) {
    %c0_i32 = arith.constant 0 : i32
    %c0_i32_0 = arith.constant 0 : i32
    %c0_i32_1 = arith.constant 0 : i32
    return %c0_i32, %c0_i32_0 : i32, i32
  }
  func.func @transform_6(%arg0: i32) -> (i32, i32) {
    %c0_i32 = arith.constant 0 : i32
    %c0_i32_0 = arith.constant 0 : i32
    %c0_i32_1 = arith.constant 0 : i32
    return %c0_i32, %c0_i32_0 : i32, i32
  }
  func.func @transform_7(%arg0: i32) -> (i32, i32) {
    %c0_i32 = arith.constant 0 : i32
    %c0_i32_0 = arith.constant 0 : i32
    return %arg0, %c0_i32 : i32, i32
  }
}

</mosaic_0001>

<llo_original>
// kernel: tpu_custom_call.1
$region0: #{tpu_custom_call.1}
  #allocation0 [shape = 'u32[]', space=smem, size = 0x4, offset = 0x4, fixed_abs, tag = 'smem constant byte address 0x4 - core index']
  #allocation1 [shape = 'u32[144,128]{1,0:T(1,128)}', space=vmem, size = 0x12000, scoped, tag = 'internal scratch']
  %s0 = inlined_call_operand.vmem [shape: bf16[256,16], index: 0, kind: input, shape index: {}]
  %s1 = inlined_call_operand.vmem [shape: bf16[16,64], index: 1, kind: input, shape index: {}]
  %s2 = inlined_call_operand.vmem [shape: f32[1,64], index: 2, kind: input, shape index: {}]
  %s3 = inlined_call_operand.vmem [shape: bf16[64,32], index: 3, kind: input, shape index: {}]
  %s4 = inlined_call_operand.vmem [shape: f32[1,32], index: 4, kind: input, shape index: {}]
  %s5 = inlined_call_operand.vmem [shape: bf16[32,128], index: 5, kind: input, shape index: {}]
  %s6 = inlined_call_operand.vmem [shape: f32[1,128], index: 6, kind: input, shape index: {}]
  %s7 = inlined_call_operand.hbm [shape: f32[256,128], index: 7, kind: output, shape index: {}]
  %s8 = sld [smem:[#allocation0]]
  $region61: #{tpu_custom_call.1} parent=0
    _
  %s10 = ssub.s32 1, %s8
  %s11 = scalar_select 0, %s10, %s8
  $region1: #{tpu_custom_call.1} parent=0
    #allocation2 [shape = 'u8[131072]{0}', space=vmem, size = 0x20000, scoped, tag = 'output window, operand 0']
    #allocation3 [shape = 's32[2]{0}', space=sflag, size = 0x8, scoped, tag = 'scoped memory for tpu_custom_call.1']
    %12 = vsyncpa [#allocation3], 0
    %s13 = scalar_lea.sflag [#allocation3], 1
    %14 = vsyncpa %s13, 0
    loop: start=0, step=1, limit=4
    $region2: #{tpu_custom_call.1} parent=1 // loop_pre_header
      _
    $region3: #{tpu_custom_call.1} parent=1 // loop_header
      %s16 = sphi 0, %s20
      %p17 = scmp.ge.s32.totalorder %s16, 4
      %s26 = sphi 0, %s28
      %s29 = sphi 0, %s26
      %s30 = sphi 0, %s29
      %s46 = sphi 0, %s30
      %s50 = sphi 0, %s50
      %s52 = sphi 0, %s50
      %s53 = sphi 0, %s52
      %s67 = sphi 0, %s53
      %s71 = sphi 0, %s71
      %s73 = sphi 0, %s71
      %s74 = sphi 0, %s73
      %s88 = sphi 0, %s74
      %s92 = sphi 0, %s92
      %s94 = sphi 0, %s92
      %s95 = sphi 0, %s94
      %s109 = sphi 0, %s95
      %s113 = sphi 0, %s113
      %s115 = sphi 0, %s113
      %s116 = sphi 0, %s115
      %s130 = sphi 0, %s116
      %s134 = sphi 0, %s134
      %s136 = sphi 0, %s134
      %s137 = sphi 0, %s136
      %s151 = sphi 0, %s137
      %s155 = sphi 0, %s155
      %s157 = sphi 0, %s155
      %s158 = sphi 0, %s157
      %s172 = sphi 0, %s158
      %s178 = sphi 0, %s180
      %s181 = sphi 0, %s178
      %s182 = sphi 0, %s181
      %s198 = sphi 0, %s182
    $region4: #{tpu_custom_call.1} parent=1 // loop_header_branch
      %19 = sbr.rel (%p17) target = $region8
    $region5: #{tpu_custom_call.1} parent=1 // loop_body
      %s21 = ssub.s32 %s16, 1
      %s22 = ssub.s32 %s16, 2
      %s23 = sadd.s32 %s16, 1
      %s24 = ssub.s32 %s16, %s23
      %p25 = scmp.eq.s32.totalorder %s24, 0
      %s27 = sadd.s32 %s26, 1
      %s28 = scalar_select %p25, %s26, %s27
      %p31 = pneg %p25
      %p32 = scmp.eq.s32.totalorder %s16, 1
      %p33 = por %p31, %p32
      %p34 = scmp.ne.s32.totalorder %s26, %s29
      %p35 = scmp.eq.s32.totalorder %s16, 0
      %p36 = por %p34, %p35
      %p37 = scmp.ne.s32.totalorder %s26, %s29
      %p38 = scmp.eq.s32.totalorder %s21, 1
      %p39 = por %p37, %p38
      %p40 = scmp.ne.s32.totalorder %s29, %s30
      %p41 = scmp.eq.s32.totalorder %s21, 0
      %p42 = por %p40, %p41
      %p43 = scmp.ne.s32.totalorder %s29, %s30
      %p44 = scmp.eq.s32.totalorder %s22, 1
      %p45 = por %p43, %p44
      %p47 = scmp.ne.s32.totalorder %s30, %s46
      %p48 = scmp.eq.s32.totalorder %s22, 0
      %p49 = por %p47, %p48
      %s51 = sadd.s32 %s50, 1
      %p54 = scmp.eq.s32.totalorder %s16, 1
      %p55 = scmp.ne.s32.totalorder %s50, %s52
      %p56 = scmp.eq.s32.totalorder %s16, 0
      %p57 = por %p55, %p56
      %p58 = scmp.ne.s32.totalorder %s50, %s52
      %p59 = scmp.eq.s32.totalorder %s21, 1
      %p60 = por %p58, %p59
      %p61 = scmp.ne.s32.totalorder %s52, %s53
      %p62 = scmp.eq.s32.totalorder %s21, 0
      %p63 = por %p61, %p62
      %p64 = scmp.ne.s32.totalorder %s52, %s53
      %p65 = scmp.eq.s32.totalorder %s22, 1
      %p66 = por %p64, %p65
      %p68 = scmp.ne.s32.totalorder %s53, %s67
      %p69 = scmp.eq.s32.totalorder %s22, 0
      %p70 = por %p68, %p69
      %s72 = sadd.s32 %s71, 1
      %p75 = scmp.eq.s32.totalorder %s16, 1
      %p76 = scmp.ne.s32.totalorder %s71, %s73
      %p77 = scmp.eq.s32.totalorder %s16, 0
      %p78 = por %p76, %p77
      %p79 = scmp.ne.s32.totalorder %s71, %s73
      %p80 = scmp.eq.s32.totalorder %s21, 1
      %p81 = por %p79, %p80
      %p82 = scmp.ne.s32.totalorder %s73, %s74
      %p83 = scmp.eq.s32.totalorder %s21, 0
      %p84 = por %p82, %p83
      %p85 = scmp.ne.s32.totalorder %s73, %s74
      %p86 = scmp.eq.s32.totalorder %s22, 1
      %p87 = por %p85, %p86
      %p89 = scmp.ne.s32.totalorder %s74, %s88
      %p90 = scmp.eq.s32.totalorder %s22, 0
      %p91 = por %p89, %p90
      %s93 = sadd.s32 %s92, 1
      %p96 = scmp.eq.s32.totalorder %s16, 1
      %p97 = scmp.ne.s32.totalorder %s92, %s94
      %p98 = scmp.eq.s32.totalorder %s16, 0
      %p99 = por %p97, %p98
      %p100 = scmp.ne.s32.totalorder %s92, %s94
      %p101 = scmp.eq.s32.totalorder %s21, 1
      %p102 = por %p100, %p101
      %p103 = scmp.ne.s32.totalorder %s94, %s95
      %p104 = scmp.eq.s32.totalorder %s21, 0
      %p105 = por %p103, %p104
      %p106 = scmp.ne.s32.totalorder %s94, %s95
      %p107 = scmp.eq.s32.totalorder %s22, 1
      %p108 = por %p106, %p107
      %p110 = scmp.ne.s32.totalorder %s95, %s109
      %p111 = scmp.eq.s32.totalorder %s22, 0
      %p112 = por %p110, %p111
      %s114 = sadd.s32 %s113, 1
      %p117 = scmp.eq.s32.totalorder %s16, 1
      %p118 = scmp.ne.s32.totalorder %s113, %s115
      %p119 = scmp.eq.s32.totalorder %s16, 0
      %p120 = por %p118, %p119
      %p121 = scmp.ne.s32.totalorder %s113, %s115
      %p122 = scmp.eq.s32.totalorder %s21, 1
      %p123 = por %p121, %p122
      %p124 = scmp.ne.s32.totalorder %s115, %s116
      %p125 = scmp.eq.s32.totalorder %s21, 0
      %p126 = por %p124, %p125
      %p127 = scmp.ne.s32.totalorder %s115, %s116
      %p128 = scmp.eq.s32.totalorder %s22, 1
      %p129 = por %p127, %p128
      %p131 = scmp.ne.s32.totalorder %s116, %s130
      %p132 = scmp.eq.s32.totalorder %s22, 0
      %p133 = por %p131, %p132
      %s135 = sadd.s32 %s134, 1
      %p138 = scmp.eq.s32.totalorder %s16, 1
      %p139 = scmp.ne.s32.totalorder %s134, %s136
      %p140 = scmp.eq.s32.totalorder %s16, 0
      %p141 = por %p139, %p140
      %p142 = scmp.ne.s32.totalorder %s134, %s136
      %p143 = scmp.eq.s32.totalorder %s21, 1
      %p144 = por %p142, %p143
      %p145 = scmp.ne.s32.totalorder %s136, %s137
      %p146 = scmp.eq.s32.totalorder %s21, 0
      %p147 = por %p145, %p146
      %p148 = scmp.ne.s32.totalorder %s136, %s137
      %p149 = scmp.eq.s32.totalorder %s22, 1
      %p150 = por %p148, %p149
      %p152 = scmp.ne.s32.totalorder %s137, %s151
      %p153 = scmp.eq.s32.totalorder %s22, 0
      %p154 = por %p152, %p153
      %s156 = sadd.s32 %s155, 1
      %p159 = scmp.eq.s32.totalorder %s16, 1
      %p160 = scmp.ne.s32.totalorder %s155, %s157
      %p161 = scmp.eq.s32.totalorder %s16, 0
      %p162 = por %p160, %p161
      %p163 = scmp.ne.s32.totalorder %s155, %s157
      %p164 = scmp.eq.s32.totalorder %s21, 1
      %p165 = por %p163, %p164
      %p166 = scmp.ne.s32.totalorder %s157, %s158
      %p167 = scmp.eq.s32.totalorder %s21, 0
      %p168 = por %p166, %p167
      %p169 = scmp.ne.s32.totalorder %s157, %s158
      %p170 = scmp.eq.s32.totalorder %s22, 1
      %p171 = por %p169, %p170
      %p173 = scmp.ne.s32.totalorder %s158, %s172
      %p174 = scmp.eq.s32.totalorder %s22, 0
      %p175 = por %p173, %p174
      %s176 = ssub.s32 %s16, %s23
      %p177 = scmp.eq.s32.totalorder %s176, 0
      %s179 = sadd.s32 %s178, 1
      %s180 = scalar_select %p177, %s178, %s179
      %p183 = pneg %p177
      %p184 = scmp.eq.s32.totalorder %s16, 1
      %p185 = por %p183, %p184
      %p186 = scmp.ne.s32.totalorder %s178, %s181
      %p187 = scmp.eq.s32.totalorder %s16, 0
      %p188 = por %p186, %p187
      %p189 = scmp.ne.s32.totalorder %s178, %s181
      %p190 = scmp.eq.s32.totalorder %s21, 1
      %p191 = por %p189, %p190
      %p192 = scmp.ne.s32.totalorder %s181, %s182
      %p193 = scmp.eq.s32.totalorder %s21, 0
      %p194 = por %p192, %p193
      %p195 = scmp.ne.s32.totalorder %s181, %s182
      %p196 = scmp.eq.s32.totalorder %s22, 1
      %p197 = por %p195, %p196
      %p199 = scmp.ne.s32.totalorder %s182, %s198
      %p200 = scmp.eq.s32.totalorder %s22, 0
      %p201 = por %p199, %p200
      %p202 = scmp.le.s32.totalorder 1, %s16
      %p203 = scmp.lt.s32.totalorder %s16, 3
      %p204 = pnand %p202, %p203
      %p205 = pneg %p204
      // Predicated region
      $region9: #{tpu_custom_call.1} parent=5 // pred_check
        _
      $region10: #{tpu_custom_call.1} parent=5 // pred_check_branch
        %207 = sbr.rel (%p204) target = $region12
      $region11: #{tpu_custom_call.1} parent=5 // pred_region
        %s208 = ssub.s32 %s16, 1
        // Predicated region
        $region13: #{tpu_custom_call.1} parent=11 // pred_check
          %p209 = pneg %p63
        $region14: #{tpu_custom_call.1} parent=11 // pred_check_branch
          %211 = sbr.rel (%p209) target = $region16
        $region15: #{tpu_custom_call.1} parent=11 // pred_region
          _
        $region16: #{tpu_custom_call.1} parent=11 // pred_fallthru
          _
        // Predicated region
        $region17: #{tpu_custom_call.1} parent=11 // pred_check
          %p212 = pneg %p84
        $region18: #{tpu_custom_call.1} parent=11 // pred_check_branch
          %214 = sbr.rel (%p212) target = $region20
        $region19: #{tpu_custom_call.1} parent=11 // pred_region
          _
        $region20: #{tpu_custom_call.1} parent=11 // pred_fallthru
          _
        // Predicated region
        $region21: #{tpu_custom_call.1} parent=11 // pred_check
          %p215 = pneg %p105
        $region22: #{tpu_custom_call.1} parent=11 // pred_check_branch
          %217 = sbr.rel (%p215) target = $region24
        $region23: #{tpu_custom_call.1} parent=11 // pred_region
          _
        $region24: #{tpu_custom_call.1} parent=11 // pred_fallthru
          _
        // Predicated region
        $region25: #{tpu_custom_call.1} parent=11 // pred_check
          %p218 = pneg %p126
        $region26: #{tpu_custom_call.1} parent=11 // pred_check_branch
          %220 = sbr.rel (%p218) target = $region28
        $region27: #{tpu_custom_call.1} parent=11 // pred_region
          _
        $region28: #{tpu_custom_call.1} parent=11 // pred_fallthru
          _
        // Predicated region
        $region29: #{tpu_custom_call.1} parent=11 // pred_check
          %p221 = pneg %p147
        $region30: #{tpu_custom_call.1} parent=11 // pred_check_branch
          %223 = sbr.rel (%p221) target = $region32
        $region31: #{tpu_custom_call.1} parent=11 // pred_region
          _
        $region32: #{tpu_custom_call.1} parent=11 // pred_fallthru
          _
        // Predicated region
        $region33: #{tpu_custom_call.1} parent=11 // pred_check
          %p224 = pneg %p168
        $region34: #{tpu_custom_call.1} parent=11 // pred_check_branch
          %226 = sbr.rel (%p224) target = $region36
        $region35: #{tpu_custom_call.1} parent=11 // pred_region
          _
        $region36: #{tpu_custom_call.1} parent=11 // pred_fallthru
          _
      $region12: #{tpu_custom_call.1} parent=5 // pred_fallthru
        _
      %p227 = scmp.lt.s32.totalorder %s16, 2
      // Predicated region
      $region37: #{tpu_custom_call.1} parent=5 // pred_check
        %p228 = pneg %p227
      $region38: #{tpu_custom_call.1} parent=5 // pred_check_branch
        %230 = sbr.rel (%p228) target = $region40
      $region39: #{tpu_custom_call.1} parent=5 // pred_region
        // Predicated region
        $region41: #{tpu_custom_call.1} parent=39 // pred_check
          %p231 = pneg %p36
        $region42: #{tpu_custom_call.1} parent=39 // pred_check_branch
          %233 = sbr.rel (%p231) target = $region44
        $region43: #{tpu_custom_call.1} parent=39 // pred_region
          %s234 = smul.u32 16, %s16
          %p235 = scmp.lt.s32.totalorder %s234, 31
          %s236 = scalar_select %p235, %s234, 31
          %s237 = smul.addr %s236, 4
          %s238 = scalar_lea.vmem %s0, %s237
          %s239 = smul.u32 16, %s16
        $region44: #{tpu_custom_call.1} parent=39 // pred_fallthru
          _
      $region40: #{tpu_custom_call.1} parent=5 // pred_fallthru
        _
      %p240 = scmp.le.s32.totalorder 1, %s16
      %p241 = scmp.lt.s32.totalorder %s16, 3
      %p242 = pnand %p240, %p241
      %p243 = pneg %p242
      // Predicated region
      $region45: #{tpu_custom_call.1} parent=5 // pred_check
        _
      $region46: #{tpu_custom_call.1} parent=5 // pred_check_branch
        %245 = sbr.rel (%p242) target = $region48
      $region47: #{tpu_custom_call.1} parent=5 // pred_region
        %s246 = ssub.s32 %s16, 1
        %s247 = smul.u32 16, %s21
        %p248 = scmp.lt.s32.totalorder %s247, 31
        %s249 = scalar_select %p248, %s247, 31
        %s250 = smul.addr %s249, 4
        %s251 = scalar_lea.vmem %s0, %s250
        %p252 = pneg %p42
        %p253 = pneg %p39
        %p254 = pneg %p63
        %p255 = pneg %p60
        %p256 = pneg %p84
        %p257 = pneg %p81
        %p258 = pneg %p105
        %p259 = pneg %p102
        %p260 = pneg %p126
        %p261 = pneg %p123
        %p262 = pneg %p147
        %p263 = pneg %p144
        %p264 = pneg %p168
        %p265 = pneg %p165
        %p266 = pneg %p194
        %p267 = pneg %p191
        %s268 = sand.u32 %s181, 1
        %s269 = scalar_lea.sflag [#allocation3], %s268
        %s270 = sand.u32 %s181, 1
        %s271 = smul.addr %s270, 128
        %s272 = scalar_lea.vmem [#allocation2], %s271
        %s273 = smul.u32 16, %s21
        %p274 = scmp.lt.s32.totalorder %s273, 31
        %s275 = scalar_select %p274, %s273, 31
        %s276 = smul.addr %s275, 4
        %s277 = scalar_lea.vmem %s0, %s276
        %s278 = smul.u32 16, %s21
        %s279 = smul.u32 16, %s21
        %v281 = vld [vmem:[%s277] sm:$0xf]
        %v282 = vld [vmem:[%s277 + $0x4] sm:$0xf]
        %v283 = vld [vmem:[%s277 + $0x8] sm:$0xf]
        %v284 = vld [vmem:[%s277 + $0xc] sm:$0xf]
        %v285 = vld [vmem:[%s277 + $0x10] sm:$0xf]
        %v286 = vld [vmem:[%s277 + $0x14] sm:$0xf]
        %v287 = vld [vmem:[%s277 + $0x18] sm:$0xf]
        %v288 = vld [vmem:[%s277 + $0x1c] sm:$0xf]
        %v289 = vld [vmem:[%s277 + $0x20] sm:$0xf]
        %v290 = vld [vmem:[%s277 + $0x24] sm:$0xf]
        %v291 = vld [vmem:[%s277 + $0x28] sm:$0xf]
        %v292 = vld [vmem:[%s277 + $0x2c] sm:$0xf]
        %v293 = vld [vmem:[%s277 + $0x30] sm:$0xf]
        %v294 = vld [vmem:[%s277 + $0x34] sm:$0xf]
        %v295 = vld [vmem:[%s277 + $0x38] sm:$0xf]
        %v296 = vld [vmem:[%s277 + $0x3c] sm:$0xf]
        %v297 = vld [vmem:[%s1] sm:$0xf]
        %v298 = vld [vmem:[%s1 + $0x4] sm:$0xf]
        %v299 = vld [vmem:[%s2] sm:$0x1]
        %v301 = vlaneseq
        %v302 = vshrl.u32 %v301, 7
        %v303 = vsub.s32 0, %v302
        %v304 = vrot.slane %v299, %v303
        %v322 = vunpack.c.l.b16 %v281
        %v323 = vunpack.c.l.b16 %v282
        %v324 = vunpack.c.l.b16 %v283
        %v325 = vunpack.c.l.b16 %v284
        %v326 = vunpack.c.l.b16 %v285
        %v327 = vunpack.c.l.b16 %v286
        %v328 = vunpack.c.l.b16 %v287
        %v329 = vunpack.c.l.b16 %v288
        %v330 = vunpack.c.l.b16 %v289
        %v331 = vunpack.c.l.b16 %v290
        %v332 = vunpack.c.l.b16 %v291
        %v333 = vunpack.c.l.b16 %v292
        %v334 = vunpack.c.l.b16 %v293
        %v335 = vunpack.c.l.b16 %v294
        %v336 = vunpack.c.l.b16 %v295
        %v337 = vunpack.c.l.b16 %v296
        %v338 = vpack.c.b16 %v323, %v322
        %v339 = vpack.c.b16 %v325, %v324
        %v340 = vpack.c.b16 %v327, %v326
        %v341 = vpack.c.b16 %v329, %v328
        %v342 = vpack.c.b16 %v331, %v330
        %v343 = vpack.c.b16 %v333, %v332
        %v344 = vpack.c.b16 %v335, %v334
        %v345 = vpack.c.b16 %v337, %v336
        %v348 = vunpack.c.l.b16 %v297
        %v349 = vunpack.c.l.b16 %v298
        %v350 = vpack.c.b16 %v349, %v348
        %vm352 = vcmask 130048
        %v354 = vsel %vm352, %v338, 0
        %v357 = vsel %vm352, %v339, 0
        %v360 = vsel %vm352, %v340, 0
        %v363 = vsel %vm352, %v341, 0
        %v366 = vsel %vm352, %v342, 0
        %v369 = vsel %vm352, %v343, 0
        %v372 = vsel %vm352, %v344, 0
        %v375 = vsel %vm352, %v345, 0
        %377 = vmatprep.subr.bf16.mxu0 0
        %378 = vmatpush1.bf16.msra.mxu0 %v350
        %379 = vmatprep.subr.bf16.mxu0 0
        %380 = vmatpush1.bf16.msra.mxu0 0
        %381 = vmatprep.subr.bf16.mxu0 0
        %382 = vmatpush1.bf16.msra.mxu0 0
        %383 = vmatprep.subr.bf16.mxu0 0
        %384 = vmatpush1.bf16.msra.mxu0 0
        %385 = vmatprep.subr.bf16.mxu0 0
        %386 = vmatpush1.bf16.msra.mxu0 0
        %387 = vmatprep.subr.bf16.mxu0 0
        %388 = vmatpush1.bf16.msra.mxu0 0
        %389 = vmatprep.subr.bf16.mxu0 0
        %390 = vmatpush1.bf16.msra.mxu0 0
        %391 = vmatprep.subr.bf16.mxu0 0
        %392 = vmatpush1.bf16.msra.mxu0 0
        %393 = vmatprep.subr.bf16.mxu0 0
        %394 = vmatpush1.bf16.msra.mxu0 0
        %395 = vmatprep.subr.bf16.mxu0 0
        %396 = vmatpush1.bf16.msra.mxu0 0
        %397 = vmatprep.subr.bf16.mxu0 0
        %398 = vmatpush1.bf16.msra.mxu0 0
        %399 = vmatprep.subr.bf16.mxu0 0
        %400 = vmatpush1.bf16.msra.mxu0 0
        %401 = vmatprep.subr.bf16.mxu0 0
        %402 = vmatpush1.bf16.msra.mxu0 0
        %403 = vmatprep.subr.bf16.mxu0 0
        %404 = vmatpush1.bf16.msra.mxu0 0
        %405 = vmatprep.subr.bf16.mxu0 0
        %406 = vmatpush1.bf16.msra.mxu0 0
        %407 = vmatprep.subr.bf16.mxu0 0
        %408 = vmatpush1.bf16.msra.mxu0 0
        %409 = vmatprep.mubr.bf16.mxu0 0
        %410 = vmatmul.mubr.bf16.gmra.mrb[0].mxu0 %v354
        %v411 = vpop.f32.mrb[0].mxu0
        %v412 = vadd.f32 %v304, %v411
        %v413 = vpop.f32.mrb[0].mxu0
        %v414 = vpop.f32.mrb[0].mxu0
        %v415 = vadd.f32 %v304, %v414
        %v416 = vpop.f32.mrb[0].mxu0
        %417 = vmatprep.mubr.bf16.mxu0 0
        %418 = vmatmul.mubr.bf16.gmra.mrb[0].mxu0 %v357
        %v419 = vpop.f32.mrb[0].mxu0
        %v420 = vadd.f32 %v304, %v419
        %v421 = vpop.f32.mrb[0].mxu0
        %v422 = vpop.f32.mrb[0].mxu0
        %v423 = vadd.f32 %v304, %v422
        %v424 = vpop.f32.mrb[0].mxu0
        %425 = vmatprep.mubr.bf16.mxu0 0
        %426 = vmatmul.mubr.bf16.gmra.mrb[0].mxu0 %v360
        %v427 = vpop.f32.mrb[0].mxu0
        %v428 = vadd.f32 %v304, %v427
        %v429 = vpop.f32.mrb[0].mxu0
        %v430 = vpop.f32.mrb[0].mxu0
        %v431 = vadd.f32 %v304, %v430
        %v432 = vpop.f32.mrb[0].mxu0
        %433 = vmatprep.mubr.bf16.mxu0 0
        %434 = vmatmul.mubr.bf16.gmra.mrb[0].mxu0 %v363
        %v435 = vpop.f32.mrb[0].mxu0
        %v436 = vadd.f32 %v304, %v435
        %v437 = vpop.f32.mrb[0].mxu0
        %v438 = vpop.f32.mrb[0].mxu0
        %v439 = vadd.f32 %v304, %v438
        %v440 = vpop.f32.mrb[0].mxu0
        %441 = vmatprep.mubr.bf16.mxu0 0
        %442 = vmatmul.mubr.bf16.gmra.mrb[0].mxu0 %v366
        %v443 = vpop.f32.mrb[0].mxu0
        %v444 = vadd.f32 %v304, %v443
        %v445 = vpop.f32.mrb[0].mxu0
        %v446 = vpop.f32.mrb[0].mxu0
        %v447 = vadd.f32 %v304, %v446
        %v448 = vpop.f32.mrb[0].mxu0
        %449 = vmatprep.mubr.bf16.mxu0 0
        %450 = vmatmul.mubr.bf16.gmra.mrb[0].mxu0 %v369
        %v451 = vpop.f32.mrb[0].mxu0
        %v452 = vadd.f32 %v304, %v451
        %v453 = vpop.f32.mrb[0].mxu0
        %v454 = vpop.f32.mrb[0].mxu0
        %v455 = vadd.f32 %v304, %v454
        %v456 = vpop.f32.mrb[0].mxu0
        %457 = vmatprep.mubr.bf16.mxu0 0
        %458 = vmatmul.mubr.bf16.gmra.mrb[0].mxu0 %v372
        %v459 = vpop.f32.mrb[0].mxu0
        %v460 = vadd.f32 %v304, %v459
        %v461 = vpop.f32.mrb[0].mxu0
        %v462 = vpop.f32.mrb[0].mxu0
        %v463 = vadd.f32 %v304, %v462
        %v464 = vpop.f32.mrb[0].mxu0
        %465 = vmatprep.mubr.bf16.mxu0 0
        %466 = vmatmul.mubr.bf16.gmra.mrb[0].mxu0 %v375
        %v467 = vpop.f32.mrb[0].mxu0
        %v468 = vadd.f32 %v304, %v467
        %v469 = vpop.f32.mrb[0].mxu0
        %v470 = vpop.f32.mrb[0].mxu0
        %v471 = vadd.f32 %v304, %v470
        %v472 = vpop.f32.mrb[0].mxu0
        %473 = vdwg.mxu0
        %v474 = vmax.f32 %v412, 0.0
        %v475 = vmax.f32 %v415, 0.0
        %v476 = vmax.f32 %v420, 0.0
        %v477 = vmax.f32 %v423, 0.0
        %v478 = vmax.f32 %v428, 0.0
        %v479 = vmax.f32 %v431, 0.0
        %v480 = vmax.f32 %v436, 0.0
        %v481 = vmax.f32 %v439, 0.0
        %v482 = vmax.f32 %v444, 0.0
        %v483 = vmax.f32 %v447, 0.0
        %v484 = vmax.f32 %v452, 0.0
        %v485 = vmax.f32 %v455, 0.0
        %v486 = vmax.f32 %v460, 0.0
        %v487 = vmax.f32 %v463, 0.0
        %v488 = vmax.f32 %v468, 0.0
        %v489 = vmax.f32 %v471, 0.0
        %v490 = vpack.c.bf16 %v475, %v474
        %v491 = vpack.c.bf16 %v477, %v476
        %v492 = vpack.c.bf16 %v479, %v478
        %v493 = vpack.c.bf16 %v481, %v480
        %v494 = vpack.c.bf16 %v483, %v482
        %v495 = vpack.c.bf16 %v485, %v484
        %v496 = vpack.c.bf16 %v487, %v486
        %v497 = vpack.c.bf16 %v489, %v488
        %v498 = vld [vmem:[%s3] sm:$0xf]
        %v499 = vld [vmem:[%s3 + $0x4] sm:$0xf]
        %v500 = vld [vmem:[%s3 + $0x8] sm:$0xf]
        %v501 = vld [vmem:[%s3 + $0xc] sm:$0xf]
        %v502 = vld [vmem:[%s3 + $0x10] sm:$0xf]
        %v503 = vld [vmem:[%s3 + $0x14] sm:$0xf]
        %v504 = vld [vmem:[%s3 + $0x18] sm:$0xf]
        %v505 = vld [vmem:[%s3 + $0x1c] sm:$0xf]
        %v506 = vld [vmem:[%s4] sm:$0x1]
        %v508 = vlaneseq
        %v509 = vshrl.u32 %v508, 7
        %v510 = vsub.s32 0, %v509
        %v511 = vrot.slane %v506, %v510
        %v521 = vunpack.c.l.b16 %v498
        %v522 = vunpack.c.l.b16 %v499
        %v523 = vunpack.c.l.b16 %v500
        %v524 = vunpack.c.l.b16 %v501
        %v525 = vunpack.c.l.b16 %v502
        %v526 = vunpack.c.l.b16 %v503
        %v527 = vunpack.c.l.b16 %v504
        %v528 = vunpack.c.l.b16 %v505
        %v529 = vpack.c.b16 %v522, %v521
        %v530 = vpack.c.b16 %v524, %v523
        %v531 = vpack.c.b16 %v526, %v525
        %v532 = vpack.c.b16 %v528, %v527
        %vm537 = vcmask 523264
        %v539 = vsel %vm537, %v490, 0
        %v542 = vsel %vm537, %v491, 0
        %v545 = vsel %vm537, %v492, 0
        %v548 = vsel %vm537, %v493, 0
        %v551 = vsel %vm537, %v494, 0
        %v554 = vsel %vm537, %v495, 0
        %v557 = vsel %vm537, %v496, 0
        %v560 = vsel %vm537, %v497, 0
        %562 = vmatprep.subr.bf16.mxu0 0
        %563 = vmatpush1.bf16.msra.mxu0 %v529
        %564 = vmatprep.subr.bf16.mxu0 0
        %565 = vmatpush1.bf16.msra.mxu0 %v530
        %566 = vmatprep.subr.bf16.mxu0 0
        %567 = vmatpush1.bf16.msra.mxu0 %v531
        %568 = vmatprep.subr.bf16.mxu0 0
        %569 = vmatpush1.bf16.msra.mxu0 %v532
        %570 = vmatprep.subr.bf16.mxu0 0
        %571 = vmatpush1.bf16.msra.mxu0 0
        %572 = vmatprep.subr.bf16.mxu0 0
        %573 = vmatpush1.bf16.msra.mxu0 0
        %574 = vmatprep.subr.bf16.mxu0 0
        %575 = vmatpush1.bf16.msra.mxu0 0
        %576 = vmatprep.subr.bf16.mxu0 0
        %577 = vmatpush1.bf16.msra.mxu0 0
        %578 = vmatprep.subr.bf16.mxu0 0
        %579 = vmatpush1.bf16.msra.mxu0 0
        %580 = vmatprep.subr.bf16.mxu0 0
        %581 = vmatpush1.bf16.msra.mxu0 0
        %582 = vmatprep.subr.bf16.mxu0 0
        %583 = vmatpush1.bf16.msra.mxu0 0
        %584 = vmatprep.subr.bf16.mxu0 0
        %585 = vmatpush1.bf16.msra.mxu0 0
        %586 = vmatprep.subr.bf16.mxu0 0
        %587 = vmatpush1.bf16.msra.mxu0 0
        %588 = vmatprep.subr.bf16.mxu0 0
        %589 = vmatpush1.bf16.msra.mxu0 0
        %590 = vmatprep.subr.bf16.mxu0 0
        %591 = vmatpush1.bf16.msra.mxu0 0
        %592 = vmatprep.subr.bf16.mxu0 0
        %593 = vmatpush1.bf16.msra.mxu0 0
        %594 = vmatprep.mubr.bf16.mxu0 0
        %595 = vmatmul.mubr.bf16.gmra.mrb[0].mxu0 %v539
        %v596 = vpop.f32.mrb[0].mxu0
        %v597 = vadd.f32 %v511, %v596
        %v598 = vpop.f32.mrb[0].mxu0
        %v599 = vpop.f32.mrb[0].mxu0
        %v600 = vadd.f32 %v511, %v599
        %v601 = vpop.f32.mrb[0].mxu0
        %602 = vmatprep.mubr.bf16.mxu0 0
        %603 = vmatmul.mubr.bf16.gmra.mrb[0].mxu0 %v542
        %v604 = vpop.f32.mrb[0].mxu0
        %v605 = vadd.f32 %v511, %v604
        %v606 = vpop.f32.mrb[0].mxu0
        %v607 = vpop.f32.mrb[0].mxu0
        %v608 = vadd.f32 %v511, %v607
        %v609 = vpop.f32.mrb[0].mxu0
        %610 = vmatprep.mubr.bf16.mxu0 0
        %611 = vmatmul.mubr.bf16.gmra.mrb[0].mxu0 %v545
        %v612 = vpop.f32.mrb[0].mxu0
        %v613 = vadd.f32 %v511, %v612
        %v614 = vpop.f32.mrb[0].mxu0
        %v615 = vpop.f32.mrb[0].mxu0
        %v616 = vadd.f32 %v511, %v615
        %v617 = vpop.f32.mrb[0].mxu0
        %618 = vmatprep.mubr.bf16.mxu0 0
        %619 = vmatmul.mubr.bf16.gmra.mrb[0].mxu0 %v548
        %v620 = vpop.f32.mrb[0].mxu0
        %v621 = vadd.f32 %v511, %v620
        %v622 = vpop.f32.mrb[0].mxu0
        %v623 = vpop.f32.mrb[0].mxu0
        %v624 = vadd.f32 %v511, %v623
        %v625 = vpop.f32.mrb[0].mxu0
        %626 = vmatprep.mubr.bf16.mxu0 0
        %627 = vmatmul.mubr.bf16.gmra.mrb[0].mxu0 %v551
        %v628 = vpop.f32.mrb[0].mxu0
        %v629 = vadd.f32 %v511, %v628
        %v630 = vpop.f32.mrb[0].mxu0
        %v631 = vpop.f32.mrb[0].mxu0
        %v632 = vadd.f32 %v511, %v631
        %v633 = vpop.f32.mrb[0].mxu0
        %634 = vmatprep.mubr.bf16.mxu0 0
        %635 = vmatmul.mubr.bf16.gmra.mrb[0].mxu0 %v554
        %v636 = vpop.f32.mrb[0].mxu0
        %v637 = vadd.f32 %v511, %v636
        %v638 = vpop.f32.mrb[0].mxu0
        %v639 = vpop.f32.mrb[0].mxu0
        %v640 = vadd.f32 %v511, %v639
        %v641 = vpop.f32.mrb[0].mxu0
        %642 = vmatprep.mubr.bf16.mxu0 0
        %643 = vmatmul.mubr.bf16.gmra.mrb[0].mxu0 %v557
        %v644 = vpop.f32.mrb[0].mxu0
        %v645 = vadd.f32 %v511, %v644
        %v646 = vpop.f32.mrb[0].mxu0
        %v647 = vpop.f32.mrb[0].mxu0
        %v648 = vadd.f32 %v511, %v647
        %v649 = vpop.f32.mrb[0].mxu0
        %650 = vmatprep.mubr.bf16.mxu0 0
        %651 = vmatmul.mubr.bf16.gmra.mrb[0].mxu0 %v560
        %v652 = vpop.f32.mrb[0].mxu0
        %v653 = vadd.f32 %v511, %v652
        %v654 = vpop.f32.mrb[0].mxu0
        %v655 = vpop.f32.mrb[0].mxu0
        %v656 = vadd.f32 %v511, %v655
        %v657 = vpop.f32.mrb[0].mxu0
        %658 = vdwg.mxu0
        %v659 = vmax.f32 %v597, 0.0
        %v660 = vmax.f32 %v600, 0.0
        %v661 = vmax.f32 %v605, 0.0
        %v662 = vmax.f32 %v608, 0.0
        %v663 = vmax.f32 %v613, 0.0
        %v664 = vmax.f32 %v616, 0.0
        %v665 = vmax.f32 %v621, 0.0
        %v666 = vmax.f32 %v624, 0.0
        %v667 = vmax.f32 %v629, 0.0
        %v668 = vmax.f32 %v632, 0.0
        %v669 = vmax.f32 %v637, 0.0
        %v670 = vmax.f32 %v640, 0.0
        %v671 = vmax.f32 %v645, 0.0
        %v672 = vmax.f32 %v648, 0.0
        %v673 = vmax.f32 %v653, 0.0
        %v674 = vmax.f32 %v656, 0.0
        %v675 = vpack.c.bf16 %v660, %v659
        %v676 = vpack.c.bf16 %v662, %v661
        %v677 = vpack.c.bf16 %v664, %v663
        %v678 = vpack.c.bf16 %v666, %v665
        %v679 = vpack.c.bf16 %v668, %v667
        %v680 = vpack.c.bf16 %v670, %v669
        %v681 = vpack.c.bf16 %v672, %v671
        %v682 = vpack.c.bf16 %v674, %v673
        %v683 = vld [vmem:[%s5] sm:$0xf]
        %v684 = vld [vmem:[%s5 + $0x4] sm:$0xf]
        %v685 = vld [vmem:[%s5 + $0x8] sm:$0xf]
        %v686 = vld [vmem:[%s5 + $0xc] sm:$0xf]
        %v687 = vld [vmem:[%s6] sm:$0x1]
        %v689 = vlaneseq
        %v690 = vshrl.u32 %v689, 7
        %v691 = vsub.s32 0, %v690
        %v692 = vrot.slane %v687, %v691
        %v698 = vunpack.c.l.b16 %v683
        %v699 = vunpack.c.l.b16 %v684
        %v700 = vunpack.c.l.b16 %v685
        %v701 = vunpack.c.l.b16 %v686
        %v702 = vpack.c.b16 %v699, %v698
        %v703 = vpack.c.b16 %v701, %v700
        %vm706 = vcmask 261120
        %v708 = vsel %vm706, %v675, 0
        %v711 = vsel %vm706, %v676, 0
        %v714 = vsel %vm706, %v677, 0
        %v717 = vsel %vm706, %v678, 0
        %v720 = vsel %vm706, %v679, 0
        %v723 = vsel %vm706, %v680, 0
        %v726 = vsel %vm706, %v681, 0
        %v729 = vsel %vm706, %v682, 0
        %731 = vmatprep.subr.bf16.mxu0 0
        %732 = vmatpush1.bf16.msra.mxu0 %v702
        %733 = vmatprep.subr.bf16.mxu0 0
        %734 = vmatpush1.bf16.msra.mxu0 %v703
        %735 = vmatprep.subr.bf16.mxu0 0
        %736 = vmatpush1.bf16.msra.mxu0 0
        %737 = vmatprep.subr.bf16.mxu0 0
        %738 = vmatpush1.bf16.msra.mxu0 0
        %739 = vmatprep.subr.bf16.mxu0 0
        %740 = vmatpush1.bf16.msra.mxu0 0
        %741 = vmatprep.subr.bf16.mxu0 0
        %742 = vmatpush1.bf16.msra.mxu0 0
        %743 = vmatprep.subr.bf16.mxu0 0
        %744 = vmatpush1.bf16.msra.mxu0 0
        %745 = vmatprep.subr.bf16.mxu0 0
        %746 = vmatpush1.bf16.msra.mxu0 0
        %747 = vmatprep.subr.bf16.mxu0 0
        %748 = vmatpush1.bf16.msra.mxu0 0
        %749 = vmatprep.subr.bf16.mxu0 0
        %750 = vmatpush1.bf16.msra.mxu0 0
        %751 = vmatprep.subr.bf16.mxu0 0
        %752 = vmatpush1.bf16.msra.mxu0 0
        %753 = vmatprep.subr.bf16.mxu0 0
        %754 = vmatpush1.bf16.msra.mxu0 0
        %755 = vmatprep.subr.bf16.mxu0 0
        %756 = vmatpush1.bf16.msra.mxu0 0
        %757 = vmatprep.subr.bf16.mxu0 0
        %758 = vmatpush1.bf16.msra.mxu0 0
        %759 = vmatprep.subr.bf16.mxu0 0
        %760 = vmatpush1.bf16.msra.mxu0 0
        %761 = vmatprep.subr.bf16.mxu0 0
        %762 = vmatpush1.bf16.msra.mxu0 0
        %763 = vmatprep.mubr.bf16.mxu0 0
        %764 = vmatmul.mubr.bf16.gmra.mrb[0].mxu0 %v708
        %v765 = vpop.f32.mrb[0].mxu0
        %v766 = vadd.f32 %v692, %v765
        %v767 = vpop.f32.mrb[0].mxu0
        %v768 = vpop.f32.mrb[0].mxu0
        %v769 = vadd.f32 %v692, %v768
        %v770 = vpop.f32.mrb[0].mxu0
        %771 = vmatprep.mubr.bf16.mxu0 0
        %772 = vmatmul.mubr.bf16.gmra.mrb[0].mxu0 %v711
        %v773 = vpop.f32.mrb[0].mxu0
        %v774 = vadd.f32 %v692, %v773
        %v775 = vpop.f32.mrb[0].mxu0
        %v776 = vpop.f32.mrb[0].mxu0
        %v777 = vadd.f32 %v692, %v776
        %v778 = vpop.f32.mrb[0].mxu0
        %779 = vmatprep.mubr.bf16.mxu0 0
        %780 = vmatmul.mubr.bf16.gmra.mrb[0].mxu0 %v714
        %v781 = vpop.f32.mrb[0].mxu0
        %v782 = vadd.f32 %v692, %v781
        %v783 = vpop.f32.mrb[0].mxu0
        %v784 = vpop.f32.mrb[0].mxu0
        %v785 = vadd.f32 %v692, %v784
        %v786 = vpop.f32.mrb[0].mxu0
        %787 = vmatprep.mubr.bf16.mxu0 0
        %788 = vmatmul.mubr.bf16.gmra.mrb[0].mxu0 %v717
        %v789 = vpop.f32.mrb[0].mxu0
        %v790 = vadd.f32 %v692, %v789
        %v791 = vpop.f32.mrb[0].mxu0
        %v792 = vpop.f32.mrb[0].mxu0
        %v793 = vadd.f32 %v692, %v792
        %v794 = vpop.f32.mrb[0].mxu0
        %795 = vmatprep.mubr.bf16.mxu0 0
        %796 = vmatmul.mubr.bf16.gmra.mrb[0].mxu0 %v720
        %v797 = vpop.f32.mrb[0].mxu0
        %v798 = vadd.f32 %v692, %v797
        %v799 = vpop.f32.mrb[0].mxu0
        %v800 = vpop.f32.mrb[0].mxu0
        %v801 = vadd.f32 %v692, %v800
        %v802 = vpop.f32.mrb[0].mxu0
        %803 = vmatprep.mubr.bf16.mxu0 0
        %804 = vmatmul.mubr.bf16.gmra.mrb[0].mxu0 %v723
        %v805 = vpop.f32.mrb[0].mxu0
        %v806 = vadd.f32 %v692, %v805
        %v807 = vpop.f32.mrb[0].mxu0
        %v808 = vpop.f32.mrb[0].mxu0
        %v809 = vadd.f32 %v692, %v808
        %v810 = vpop.f32.mrb[0].mxu0
        %811 = vmatprep.mubr.bf16.mxu0 0
        %812 = vmatmul.mubr.bf16.gmra.mrb[0].mxu0 %v726
        %v813 = vpop.f32.mrb[0].mxu0
        %v814 = vadd.f32 %v692, %v813
        %v815 = vpop.f32.mrb[0].mxu0
        %v816 = vpop.f32.mrb[0].mxu0
        %v817 = vadd.f32 %v692, %v816
        %v818 = vpop.f32.mrb[0].mxu0
        %819 = vmatprep.mubr.bf16.mxu0 0
        %820 = vmatmul.mubr.bf16.gmra.mrb[0].mxu0 %v729
        %v821 = vpop.f32.mrb[0].mxu0
        %v822 = vadd.f32 %v692, %v821
        %v823 = vpop.f32.mrb[0].mxu0
        %v824 = vpop.f32.mrb[0].mxu0
        %v825 = vadd.f32 %v692, %v824
        %v826 = vpop.f32.mrb[0].mxu0
        %827 = vdwg.mxu0
        %828 = vst [vmem:[%s272] sm:$0xff] %v766
        %829 = vst [vmem:[%s272 + $0x8] sm:$0xff] %v769
        %830 = vst [vmem:[%s272 + $0x10] sm:$0xff] %v774
        %831 = vst [vmem:[%s272 + $0x18] sm:$0xff] %v777
        %832 = vst [vmem:[%s272 + $0x20] sm:$0xff] %v782
        %833 = vst [vmem:[%s272 + $0x28] sm:$0xff] %v785
        %834 = vst [vmem:[%s272 + $0x30] sm:$0xff] %v790
        %835 = vst [vmem:[%s272 + $0x38] sm:$0xff] %v793
        %836 = vst [vmem:[%s272 + $0x40] sm:$0xff] %v798
        %837 = vst [vmem:[%s272 + $0x48] sm:$0xff] %v801
        %838 = vst [vmem:[%s272 + $0x50] sm:$0xff] %v806
        %839 = vst [vmem:[%s272 + $0x58] sm:$0xff] %v809
        %840 = vst [vmem:[%s272 + $0x60] sm:$0xff] %v814
        %841 = vst [vmem:[%s272 + $0x68] sm:$0xff] %v817
        %842 = vst [vmem:[%s272 + $0x70] sm:$0xff] %v822
        %843 = vst [vmem:[%s272 + $0x78] sm:$0xff] %v825
        %s844 = sand.u32 %s181, 1
        %s845 = scalar_lea.sflag [#allocation3], %s844
        %s846 = sand.u32 %s181, 1
        %s847 = smul.addr %s846, 128
        %s848 = scalar_lea.vmem [#allocation2], %s847
        // Predicated region
        $region49: #{tpu_custom_call.1} parent=47 // pred_check
          %p849 = pneg %p191
        $region50: #{tpu_custom_call.1} parent=47 // pred_check_branch
          %851 = sbr.rel (%p849) target = $region52
        $region51: #{tpu_custom_call.1} parent=47 // pred_region
          %s852 = smul.u32 16, %s21
          %s854 = ssub.s32 2048, 2048
          %855 = vsyncadd %s845, %s854
          %s856 = smul.addr %s852, 128
          %s857 = scalar_lea.hbm %s7, %s856
          %s858 = sshll.u32 %s848, 4
          %s859 = int_to_ptr.vmem [resolvable:$true] %s858
          %864 = dma.vmem_to_hbm [thread:$0]  %s859, 2048, %s857, %s845, 128, 128, 8
        $region52: #{tpu_custom_call.1} parent=47 // pred_fallthru
          _
      $region48: #{tpu_custom_call.1} parent=5 // pred_fallthru
        _
      %p865 = scmp.le.s32.totalorder 2, %s16
      // Predicated region
      $region53: #{tpu_custom_call.1} parent=5 // pred_check
        %p866 = pneg %p865
      $region54: #{tpu_custom_call.1} parent=5 // pred_check_branch
        %868 = sbr.rel (%p866) target = $region56
      $region55: #{tpu_custom_call.1} parent=5 // pred_region
        %s869 = ssub.s32 %s16, 2
        // Predicated region
        $region57: #{tpu_custom_call.1} parent=55 // pred_check
          %p870 = pneg %p197
        $region58: #{tpu_custom_call.1} parent=55 // pred_check_branch
          %872 = sbr.rel (%p870) target = $region60
        $region59: #{tpu_custom_call.1} parent=55 // pred_region
          %s873 = sand.u32 %s182, 1
          %s874 = scalar_lea.sflag [#allocation3], %s873
          %s875 = sand.u32 %s182, 1
          %s876 = smul.addr %s875, 128
          %s877 = scalar_lea.vmem [#allocation2], %s876
          %878 = dma.done %s874, 2048
        $region60: #{tpu_custom_call.1} parent=55 // pred_fallthru
          _
      $region56: #{tpu_custom_call.1} parent=5 // pred_fallthru
        _
    $region6: #{tpu_custom_call.1} parent=1 // loop_footer
      %s20 = sadd.s32 1, %s16
    $region7: #{tpu_custom_call.1} parent=1 // loop_footer_branch
      %15 = sbr.rel target = $region3
    $region8: #{tpu_custom_call.1} parent=1 // loop_exit
      _
    %879 = vsyncpa [#allocation3], 1
    %s880 = scalar_lea.sflag [#allocation3], 1
    %881 = vsyncpa %s880, 1

</llo_original>
